<compile_context>
chip_gen: v5e
topology: v5e:2x2
jax: 0.10.0
libtpu: 0.0.40
codegen_flags: <defaults>
</compile_context>

<pallas_src>
from functools import partial

import jax
import jax.numpy as jnp
from jax.experimental import pallas as pl
from jax.experimental.pallas import tpu as pltpu


def compute_same_pad(kernel_size, stride):
    return tuple(((k - 1) * s + 1) // 2 for k, s in zip(kernel_size, stride))


def _round_up(x, m):
    return ((x + m - 1) // m) * m


def _im2col_matmul_kernel(p_ref, w_ref, b_ref, o_ref):
    # p_ref: (TR, K)      im2col patch rows for this row tile
    # w_ref: (K, CoutP)   flattened (kh,kw,cin) -> cout weights, lane-padded
    # b_ref: (1, CoutP)   lane-padded bias (f32)
    # o_ref: (TR, CoutP)  lane-dense contiguous output slab
    acc = jnp.dot(p_ref[...], w_ref[...], preferred_element_type=jnp.float32)
    o_ref[...] = (acc + b_ref[...]).astype(o_ref.dtype)


def conv2d_zeros_forward(x, weight, bias, *, stride=(1, 1), padding="same",
                         row_block=512, use_bf16=False):
    """Forward of Conv2dZeros: y = conv2d(x, weight) + bias.  NCHW in / out."""
    assert tuple(stride) == (1, 1), "Conv2dZeros uses stride (1, 1)"
    N, Cin, H, W = x.shape
    Cout, Cin_w, KH, KW = weight.shape
    assert Cin_w == Cin
    if padding == "same":
        # Symmetric 'same' padding only matches PyTorch for odd kernel sizes.
        assert KH % 2 == 1 and KW % 2 == 1
        ph, pw = compute_same_pad((KH, KW), stride)
    else:  # 'valid'
        ph, pw = 0, 0
    Hp, Wp = H + 2 * ph, W + 2 * pw
    Ho, Wo = Hp - KH + 1, Wp - KW + 1
    K = KH * KW * Cin

    comp_dtype = jnp.bfloat16 if use_bf16 else jnp.float32

    # ---- wrapper-side layout plumbing (kept out of the kernel body) ----
    # NCHW -> NHWC + zero "same" padding.
    x_nhwc = jnp.transpose(x, (0, 2, 3, 1))
    xp = jnp.pad(x_nhwc, ((0, 0), (ph, ph), (pw, pw), (0, 0)))
    # im2col: tap-major, channel-minor columns -> (N*Ho*Wo, KH*KW*Cin).
    taps = [xp[:, kh:kh + Ho, kw:kw + Wo, :]
            for kh in range(KH) for kw in range(KW)]
    patches = jnp.stack(taps, axis=3).reshape(N * Ho * Wo, K).astype(comp_dtype)
    # Weight (Cout, Cin, KH, KW) -> (KH*KW*Cin, Cout), same column ordering.
    w_mat = jnp.transpose(weight, (2, 3, 1, 0)).reshape(K, Cout).astype(comp_dtype)

    # Lane-dense output: pad Cout up to a multiple of 128 lanes.
    CoutP = _round_up(Cout, 128)
    w_mat = jnp.pad(w_mat, ((0, 0), (0, CoutP - Cout)))
    b_row = jnp.pad(bias.reshape(1, Cout).astype(jnp.float32),
                    ((0, 0), (0, CoutP - Cout)))

    # Row tiling: flatten batch + spatial into one row axis, tile in blocks.
    R = N * Ho * Wo
    TR = _round_up(max(8, min(row_block, _round_up(R, 8))), 8)
    Rp = _round_up(R, TR)
    patches = jnp.pad(patches, ((0, Rp - R), (0, 0)))

    out_flat = pl.pallas_call(
        _im2col_matmul_kernel,
        out_shape=jax.ShapeDtypeStruct((Rp, CoutP), jnp.float32),
        grid=(Rp // TR,),
        in_specs=[
            pl.BlockSpec((TR, K), lambda r: (r, 0)),
            pl.BlockSpec((K, CoutP), lambda r: (0, 0)),
            pl.BlockSpec((1, CoutP), lambda r: (0, 0)),
        ],
        out_specs=pl.BlockSpec((TR, CoutP), lambda r: (r, 0)),
        compiler_params=pltpu.CompilerParams(
            dimension_semantics=("parallel",)),
    )(patches, w_mat, b_row)

    # Drop the row / lane padding, back to NCHW in the wrapper.
    out = out_flat[:R, :Cout].reshape(N, Ho, Wo, Cout)
    return jnp.transpose(out, (0, 3, 1, 2))


def init_conv2d_zeros_params(in_channels, out_channels, kernel_size=(3, 3)):
    # Conv2dZeros zero-initializes both weight and bias.
    w = jnp.zeros((out_channels, in_channels) + tuple(kernel_size), jnp.float32)
    b = jnp.zeros((out_channels,), jnp.float32)
    return w, b


def _reference_conv(x, w, b):
    out = jax.lax.conv_general_dilated(
        x, w, window_strides=(1, 1), padding=((1, 1), (1, 1)),
        dimension_numbers=("NCHW", "OIHW", "NCHW"),
        precision=jax.lax.Precision.HIGHEST)
    return out + b.reshape(1, -1, 1, 1)


if __name__ == "__main__":
    N, Cin, H, W = 2, 4, 16, 16
    Cout = 8

    key = jax.random.PRNGKey(0)
    kx, kw, kb = jax.random.split(key, 3)
    x = jax.random.normal(kx, (N, Cin, H, W), jnp.float32)

    # 1) Module semantics: zero-initialized conv -> forward output is all zeros.
    w0, b0 = init_conv2d_zeros_params(Cin, Cout, (3, 3))
    y0 = conv2d_zeros_forward(x, w0, b0)
    jax.block_until_ready(y0)
    assert y0.shape == (N, Cout, H, W)
    assert jnp.all(y0 == 0.0)

    # 2) Conv math (weights become non-zero once trained) vs pure-JAX reference.
    w1 = 0.1 * jax.random.normal(kw, (Cout, Cin, 3, 3), jnp.float32)
    b1 = 0.1 * jax.random.normal(kb, (Cout,), jnp.float32)
    y1 = conv2d_zeros_forward(x, w1, b1)
    y_ref = _reference_conv(x, w1, b1)
    jax.block_until_ready((y1, y_ref))
    assert y1.shape == y_ref.shape
    assert jnp.allclose(y1, y_ref, atol=2e-2, rtol=2e-2), float(
        jnp.max(jnp.abs(y1 - y_ref)))

    # 3) Multi-step tiled grid path (several parallel row tiles).
    y2 = conv2d_zeros_forward(x, w1, b1, row_block=128)
    jax.block_until_ready(y2)
    assert jnp.allclose(y2, y_ref, atol=2e-2, rtol=2e-2), float(
        jnp.max(jnp.abs(y2 - y_ref)))

    # 4) bf16 fast path (v6e/v7x), looser tolerance vs the f32 reference.
    y3 = conv2d_zeros_forward(x, w1, b1, use_bf16=True)
    jax.block_until_ready(y3)
    assert jnp.allclose(y3, y_ref, atol=1e-1, rtol=1e-1), float(
        jnp.max(jnp.abs(y3 - y_ref)))

    print("KERNEL_OK")
</pallas_src>

<mosaic_0001>
module attributes {stable_mosaic.version = 11 : i64} {
  func.func @_im2col_matmul_kernel(%arg0: i32, %arg1: memref<512x36xf32, #tpu.memory_space<vmem>>, %arg2: memref<36x128xf32, #tpu.memory_space<vmem>>, %arg3: memref<1x128xf32, #tpu.memory_space<vmem>>, %arg4: memref<512x128xf32, #tpu.memory_space<vmem>>) attributes {dimension_semantics = [#tpu.dimension_semantics<parallel>], iteration_bounds = array<i64: 1>, scalar_prefetch = 0 : i64, scratch_operands = 0 : i64, tpu.core_type = #tpu.core_type<tc>, window_params = [{transform_indices = @transform_0, window_bounds = array<i64: 512, 36>}, {pipeline_mode = #tpu.pipeline_mode<synchronous>, transform_indices = @transform_1, window_bounds = array<i64: 36, 128>}, {pipeline_mode = #tpu.pipeline_mode<synchronous>, transform_indices = @transform_2, window_bounds = array<i64: 1, 128>}, {transform_indices = @transform_3, window_bounds = array<i64: 512, 128>}]} {
    %c0 = arith.constant 0 : index
    %c0_0 = arith.constant 0 : index
    %0 = vector.load %arg1[%c0, %c0_0] : memref<512x36xf32, #tpu.memory_space<vmem>>, vector<512x36xf32>
    %c0_1 = arith.constant 0 : index
    %c0_2 = arith.constant 0 : index
    %1 = vector.load %arg2[%c0_1, %c0_2] : memref<36x128xf32, #tpu.memory_space<vmem>>, vector<36x128xf32>
    %cst = arith.constant dense<0.000000e+00> : vector<512x128xf32>
    %2 = tpu.matmul %0, %1, %cst {dimension_numbers = #tpu.dot_dimension_numbers<[1], [0], [0], [1], [0, 0, 1, 1], [], []>} : vector<512x36xf32>, vector<36x128xf32>, vector<512x128xf32> -> vector<512x128xf32>
    %c0_3 = arith.constant 0 : index
    %c0_4 = arith.constant 0 : index
    %3 = vector.load %arg3[%c0_3, %c0_4] : memref<1x128xf32, #tpu.memory_space<vmem>>, vector<1x128xf32>
    %4 = vector.broadcast %3 : vector<1x128xf32> to vector<512x128xf32>
    %5 = arith.addf %2, %4 : vector<512x128xf32>
    %c0_5 = arith.constant 0 : index
    %c0_6 = arith.constant 0 : index
    %6 = vector.load %arg4[%c0_5, %c0_6] : memref<512x128xf32, #tpu.memory_space<vmem>>, vector<512x128xf32>
    tpu.vector_store %arg4[%c0_5, %c0_6], %5 {strides = array<i32>} : memref<512x128xf32, #tpu.memory_space<vmem>>, vector<512x128xf32>,
    return
  }
  func.func @transform_0(%arg0: i32) -> (i32, i32) {
    %c0_i32 = arith.constant 0 : i32
    %c0_i32_0 = arith.constant 0 : i32
    return %arg0, %c0_i32 : i32, i32
  }
  func.func @transform_1(%arg0: i32) -> (i32, i32) {
    %c0_i32 = arith.constant 0 : i32
    %c0_i32_0 = arith.constant 0 : i32
    %c0_i32_1 = arith.constant 0 : i32
    return %c0_i32, %c0_i32_0 : i32, i32
  }
  func.func @transform_2(%arg0: i32) -> (i32, i32) {
    %c0_i32 = arith.constant 0 : i32
    %c0_i32_0 = arith.constant 0 : i32
    %c0_i32_1 = arith.constant 0 : i32
    return %c0_i32, %c0_i32_0 : i32, i32
  }
  func.func @transform_3(%arg0: i32) -> (i32, i32) {
    %c0_i32 = arith.constant 0 : i32
    %c0_i32_0 = arith.constant 0 : i32
    return %arg0, %c0_i32 : i32, i32
  }
}

</mosaic_0001>

<llo_original>
// kernel: tpu_custom_call.1
$region0: #{tpu_custom_call.1}
  #allocation0 [shape = 'u32[]', space=smem, size = 0x4, offset = 0x4, fixed_abs, tag = 'smem constant byte address 0x4 - core index']
  #allocation1 [shape = 'u32[72,128]{1,0:T(1,128)}', space=vmem, size = 0x9000, scoped, tag = 'internal scratch']
  %s0 = inlined_call_operand.vmem [shape: f32[512,36], index: 0, kind: input, shape index: {}]
  %s1 = inlined_call_operand.vmem [shape: f32[36,128], index: 1, kind: input, shape index: {}]
  %s2 = inlined_call_operand.vmem [shape: f32[1,128], index: 2, kind: input, shape index: {}]
  %s3 = inlined_call_operand.hbm [shape: f32[512,128], index: 3, kind: output, shape index: {}]
  %s4 = sld [smem:[#allocation0]]
  $region22: #{tpu_custom_call.1} parent=0
    _
  %s6 = ssub.s32 1, %s4
  %s7 = scalar_select 0, %s6, %s4
  $region1: #{tpu_custom_call.1} parent=0
    #allocation2 [shape = 'u8[262144]{0}', space=vmem, size = 0x40000, scoped, tag = 'output window, operand 0, single buffered']
    #allocation3 [shape = 's32[1]{0}', space=sflag, size = 0x4, scoped, tag = 'scoped memory for tpu_custom_call.1']
    %8 = vsyncpa [#allocation3], 0
    // Predicated region
    $region2: #{tpu_custom_call.1} parent=1 // pred_check
      _
    $region3: #{tpu_custom_call.1} parent=1 // pred_check_branch
      %10 = sbr.rel (0) target = $region5
    $region4: #{tpu_custom_call.1} parent=1 // pred_region
      _
    $region5: #{tpu_custom_call.1} parent=1 // pred_fallthru
      _
    // Predicated region
    $region6: #{tpu_custom_call.1} parent=1 // pred_check
      _
    $region7: #{tpu_custom_call.1} parent=1 // pred_check_branch
      %12 = sbr.rel (0) target = $region9
    $region8: #{tpu_custom_call.1} parent=1 // pred_region
      _
    $region9: #{tpu_custom_call.1} parent=1 // pred_fallthru
      _
    // Predicated region
    $region10: #{tpu_custom_call.1} parent=1 // pred_check
      _
    $region11: #{tpu_custom_call.1} parent=1 // pred_check_branch
      %14 = sbr.rel (0) target = $region13
    $region12: #{tpu_custom_call.1} parent=1 // pred_region
      _
    $region13: #{tpu_custom_call.1} parent=1 // pred_fallthru
      _
    %v15 = vld [vmem:[%s0] sm:$0xff]
    %v16 = vld [vmem:[%s0 + $0x8] sm:$0xff]
    %v17 = vld [vmem:[%s0 + $0x10] sm:$0xff]
    %v18 = vld [vmem:[%s0 + $0x18] sm:$0xff]
    %v19 = vld [vmem:[%s0 + $0x20] sm:$0xff]
    %v20 = vld [vmem:[%s0 + $0x28] sm:$0xff]
    %v21 = vld [vmem:[%s0 + $0x30] sm:$0xff]
    %v22 = vld [vmem:[%s0 + $0x38] sm:$0xff]
    %v23 = vld [vmem:[%s0 + $0x40] sm:$0xff]
    %v24 = vld [vmem:[%s0 + $0x48] sm:$0xff]
    %v25 = vld [vmem:[%s0 + $0x50] sm:$0xff]
    %v26 = vld [vmem:[%s0 + $0x58] sm:$0xff]
    %v27 = vld [vmem:[%s0 + $0x60] sm:$0xff]
    %v28 = vld [vmem:[%s0 + $0x68] sm:$0xff]
    %v29 = vld [vmem:[%s0 + $0x70] sm:$0xff]
    %v30 = vld [vmem:[%s0 + $0x78] sm:$0xff]
    %v31 = vld [vmem:[%s0 + $0x80] sm:$0xff]
    %v32 = vld [vmem:[%s0 + $0x88] sm:$0xff]
    %v33 = vld [vmem:[%s0 + $0x90] sm:$0xff]
    %v34 = vld [vmem:[%s0 + $0x98] sm:$0xff]
    %v35 = vld [vmem:[%s0 + $0xa0] sm:$0xff]
    %v36 = vld [vmem:[%s0 + $0xa8] sm:$0xff]
    %v37 = vld [vmem:[%s0 + $0xb0] sm:$0xff]
    %v38 = vld [vmem:[%s0 + $0xb8] sm:$0xff]
    %v39 = vld [vmem:[%s0 + $0xc0] sm:$0xff]
    %v40 = vld [vmem:[%s0 + $0xc8] sm:$0xff]
    %v41 = vld [vmem:[%s0 + $0xd0] sm:$0xff]
    %v42 = vld [vmem:[%s0 + $0xd8] sm:$0xff]
    %v43 = vld [vmem:[%s0 + $0xe0] sm:$0xff]
    %v44 = vld [vmem:[%s0 + $0xe8] sm:$0xff]
    %v45 = vld [vmem:[%s0 + $0xf0] sm:$0xff]
    %v46 = vld [vmem:[%s0 + $0xf8] sm:$0xff]
    %v47 = vld [vmem:[%s0 + $0x100] sm:$0xff]
    %v48 = vld [vmem:[%s0 + $0x108] sm:$0xff]
    %v49 = vld [vmem:[%s0 + $0x110] sm:$0xff]
    %v50 = vld [vmem:[%s0 + $0x118] sm:$0xff]
    %v51 = vld [vmem:[%s0 + $0x120] sm:$0xff]
    %v52 = vld [vmem:[%s0 + $0x128] sm:$0xff]
    %v53 = vld [vmem:[%s0 + $0x130] sm:$0xff]
    %v54 = vld [vmem:[%s0 + $0x138] sm:$0xff]
    %v55 = vld [vmem:[%s0 + $0x140] sm:$0xff]
    %v56 = vld [vmem:[%s0 + $0x148] sm:$0xff]
    %v57 = vld [vmem:[%s0 + $0x150] sm:$0xff]
    %v58 = vld [vmem:[%s0 + $0x158] sm:$0xff]
    %v59 = vld [vmem:[%s0 + $0x160] sm:$0xff]
    %v60 = vld [vmem:[%s0 + $0x168] sm:$0xff]
    %v61 = vld [vmem:[%s0 + $0x170] sm:$0xff]
    %v62 = vld [vmem:[%s0 + $0x178] sm:$0xff]
    %v63 = vld [vmem:[%s0 + $0x180] sm:$0xff]
    %v64 = vld [vmem:[%s0 + $0x188] sm:$0xff]
    %v65 = vld [vmem:[%s0 + $0x190] sm:$0xff]
    %v66 = vld [vmem:[%s0 + $0x198] sm:$0xff]
    %v67 = vld [vmem:[%s0 + $0x1a0] sm:$0xff]
    %v68 = vld [vmem:[%s0 + $0x1a8] sm:$0xff]
    %v69 = vld [vmem:[%s0 + $0x1b0] sm:$0xff]
    %v70 = vld [vmem:[%s0 + $0x1b8] sm:$0xff]
    %v71 = vld [vmem:[%s0 + $0x1c0] sm:$0xff]
    %v72 = vld [vmem:[%s0 + $0x1c8] sm:$0xff]
    %v73 = vld [vmem:[%s0 + $0x1d0] sm:$0xff]
    %v74 = vld [vmem:[%s0 + $0x1d8] sm:$0xff]
    %v75 = vld [vmem:[%s0 + $0x1e0] sm:$0xff]
    %v76 = vld [vmem:[%s0 + $0x1e8] sm:$0xff]
    %v77 = vld [vmem:[%s0 + $0x1f0] sm:$0xff]
    %v78 = vld [vmem:[%s0 + $0x1f8] sm:$0xff]
    %v79 = vld [vmem:[%s1] sm:$0xff]
    %v80 = vld [vmem:[%s1 + $0x8] sm:$0xff]
    %v81 = vld [vmem:[%s1 + $0x10] sm:$0xff]
    %v82 = vld [vmem:[%s1 + $0x18] sm:$0xff]
    %v83 = vld [vmem:[%s1 + $0x20] sm:$0xf]
    %v84 = vld [vmem:[%s2] sm:$0x1]
    %v86 = vperm.slane %v84, 0
    %vm88 = vcmask 293888
    %v90 = vsel %vm88, %v15, 0
    %v93 = vsel %vm88, %v16, 0
    %v96 = vsel %vm88, %v17, 0
    %v99 = vsel %vm88, %v18, 0
    %v102 = vsel %vm88, %v19, 0
    %v105 = vsel %vm88, %v20, 0
    %v108 = vsel %vm88, %v21, 0
    %v111 = vsel %vm88, %v22, 0
    %v114 = vsel %vm88, %v23, 0
    %v117 = vsel %vm88, %v24, 0
    %v120 = vsel %vm88, %v25, 0
    %v123 = vsel %vm88, %v26, 0
    %v126 = vsel %vm88, %v27, 0
    %v129 = vsel %vm88, %v28, 0
    %v132 = vsel %vm88, %v29, 0
    %v135 = vsel %vm88, %v30, 0
    %v138 = vsel %vm88, %v31, 0
    %v141 = vsel %vm88, %v32, 0
    %v144 = vsel %vm88, %v33, 0
    %v147 = vsel %vm88, %v34, 0
    %v150 = vsel %vm88, %v35, 0
    %v153 = vsel %vm88, %v36, 0
    %v156 = vsel %vm88, %v37, 0
    %v159 = vsel %vm88, %v38, 0
    %v162 = vsel %vm88, %v39, 0
    %v165 = vsel %vm88, %v40, 0
    %v168 = vsel %vm88, %v41, 0
    %v171 = vsel %vm88, %v42, 0
    %v174 = vsel %vm88, %v43, 0
    %v177 = vsel %vm88, %v44, 0
    %v180 = vsel %vm88, %v45, 0
    %v183 = vsel %vm88, %v46, 0
    %v186 = vsel %vm88, %v47, 0
    %v189 = vsel %vm88, %v48, 0
    %v192 = vsel %vm88, %v49, 0
    %v195 = vsel %vm88, %v50, 0
    %v198 = vsel %vm88, %v51, 0
    %v201 = vsel %vm88, %v52, 0
    %v204 = vsel %vm88, %v53, 0
    %v207 = vsel %vm88, %v54, 0
    %v210 = vsel %vm88, %v55, 0
    %v213 = vsel %vm88, %v56, 0
    %v216 = vsel %vm88, %v57, 0
    %v219 = vsel %vm88, %v58, 0
    %v222 = vsel %vm88, %v59, 0
    %v225 = vsel %vm88, %v60, 0
    %v228 = vsel %vm88, %v61, 0
    %v231 = vsel %vm88, %v62, 0
    %v234 = vsel %vm88, %v63, 0
    %v237 = vsel %vm88, %v64, 0
    %v240 = vsel %vm88, %v65, 0
    %v243 = vsel %vm88, %v66, 0
    %v246 = vsel %vm88, %v67, 0
    %v249 = vsel %vm88, %v68, 0
    %v252 = vsel %vm88, %v69, 0
    %v255 = vsel %vm88, %v70, 0
    %v258 = vsel %vm88, %v71, 0
    %v261 = vsel %vm88, %v72, 0
    %v264 = vsel %vm88, %v73, 0
    %v267 = vsel %vm88, %v74, 0
    %v270 = vsel %vm88, %v75, 0
    %v273 = vsel %vm88, %v76, 0
    %v276 = vsel %vm88, %v77, 0
    %v279 = vsel %vm88, %v78, 0
    %vm281 = vcmask 1043456
    %v283 = vsel %vm281, %v83, 0
    %285 = vmatpush.msra.mxu0 0.0
    %286 = vmatpush.msra.mxu0 0.0
    %287 = vmatpush.msra.mxu0 0.0
    %288 = vmatpush.msra.mxu0 0.0
    %289 = vmatpush.msra.mxu0 0.0
    %290 = vmatpush.msra.mxu0 0.0
    %291 = vmatpush.msra.mxu0 0.0
    %292 = vmatpush.msra.mxu0 0.0
    %293 = vmatpush.msra.mxu0 0.0
    %294 = vmatpush.msra.mxu0 0.0
    %295 = vmatpush.msra.mxu0 0.0
    %296 = vmatpush.msra.mxu0 %v283
    %297 = vmatpush.msra.mxu0 %v82
    %298 = vmatpush.msra.mxu0 %v81
    %299 = vmatpush.msra.mxu0 %v80
    %300 = vmatpush.msra.mxu0 %v79
    %301 = vmatmul.f32.gmra.mxu0 %v90
    %v302 = vpop.f32.mrf.mxu0
    %v303 = vadd.f32 %v86, %v302
    %304 = vmatmul.f32.gmra.mxu0 %v93
    %v305 = vpop.f32.mrf.mxu0
    %v306 = vadd.f32 %v86, %v305
    %307 = vmatmul.f32.gmra.mxu0 %v96
    %v308 = vpop.f32.mrf.mxu0
    %v309 = vadd.f32 %v86, %v308
    %310 = vmatmul.f32.gmra.mxu0 %v99
    %v311 = vpop.f32.mrf.mxu0
    %v312 = vadd.f32 %v86, %v311
    %313 = vmatmul.f32.gmra.mxu0 %v102
    %v314 = vpop.f32.mrf.mxu0
    %v315 = vadd.f32 %v86, %v314
    %316 = vmatmul.f32.gmra.mxu0 %v105
    %v317 = vpop.f32.mrf.mxu0
    %v318 = vadd.f32 %v86, %v317
    %319 = vmatmul.f32.gmra.mxu0 %v108
    %v320 = vpop.f32.mrf.mxu0
    %v321 = vadd.f32 %v86, %v320
    %322 = vmatmul.f32.gmra.mxu0 %v111
    %v323 = vpop.f32.mrf.mxu0
    %v324 = vadd.f32 %v86, %v323
    %325 = vmatmul.f32.gmra.mxu0 %v114
    %v326 = vpop.f32.mrf.mxu0
    %v327 = vadd.f32 %v86, %v326
    %328 = vmatmul.f32.gmra.mxu0 %v117
    %v329 = vpop.f32.mrf.mxu0
    %v330 = vadd.f32 %v86, %v329
    %331 = vmatmul.f32.gmra.mxu0 %v120
    %v332 = vpop.f32.mrf.mxu0
    %v333 = vadd.f32 %v86, %v332
    %334 = vmatmul.f32.gmra.mxu0 %v123
    %v335 = vpop.f32.mrf.mxu0
    %v336 = vadd.f32 %v86, %v335
    %337 = vmatmul.f32.gmra.mxu0 %v126
    %v338 = vpop.f32.mrf.mxu0
    %v339 = vadd.f32 %v86, %v338
    %340 = vmatmul.f32.gmra.mxu0 %v129
    %v341 = vpop.f32.mrf.mxu0
    %v342 = vadd.f32 %v86, %v341
    %343 = vmatmul.f32.gmra.mxu0 %v132
    %v344 = vpop.f32.mrf.mxu0
    %v345 = vadd.f32 %v86, %v344
    %346 = vmatmul.f32.gmra.mxu0 %v135
    %v347 = vpop.f32.mrf.mxu0
    %v348 = vadd.f32 %v86, %v347
    %349 = vmatmul.f32.gmra.mxu0 %v138
    %v350 = vpop.f32.mrf.mxu0
    %v351 = vadd.f32 %v86, %v350
    %352 = vmatmul.f32.gmra.mxu0 %v141
    %v353 = vpop.f32.mrf.mxu0
    %v354 = vadd.f32 %v86, %v353
    %355 = vmatmul.f32.gmra.mxu0 %v144
    %v356 = vpop.f32.mrf.mxu0
    %v357 = vadd.f32 %v86, %v356
    %358 = vmatmul.f32.gmra.mxu0 %v147
    %v359 = vpop.f32.mrf.mxu0
    %v360 = vadd.f32 %v86, %v359
    %361 = vmatmul.f32.gmra.mxu0 %v150
    %v362 = vpop.f32.mrf.mxu0
    %v363 = vadd.f32 %v86, %v362
    %364 = vmatmul.f32.gmra.mxu0 %v153
    %v365 = vpop.f32.mrf.mxu0
    %v366 = vadd.f32 %v86, %v365
    %367 = vmatmul.f32.gmra.mxu0 %v156
    %v368 = vpop.f32.mrf.mxu0
    %v369 = vadd.f32 %v86, %v368
    %370 = vmatmul.f32.gmra.mxu0 %v159
    %v371 = vpop.f32.mrf.mxu0
    %v372 = vadd.f32 %v86, %v371
    %373 = vmatmul.f32.gmra.mxu0 %v162
    %v374 = vpop.f32.mrf.mxu0
    %v375 = vadd.f32 %v86, %v374
    %376 = vmatmul.f32.gmra.mxu0 %v165
    %v377 = vpop.f32.mrf.mxu0
    %v378 = vadd.f32 %v86, %v377
    %379 = vmatmul.f32.gmra.mxu0 %v168
    %v380 = vpop.f32.mrf.mxu0
    %v381 = vadd.f32 %v86, %v380
    %382 = vmatmul.f32.gmra.mxu0 %v171
    %v383 = vpop.f32.mrf.mxu0
    %v384 = vadd.f32 %v86, %v383
    %385 = vmatmul.f32.gmra.mxu0 %v174
    %v386 = vpop.f32.mrf.mxu0
    %v387 = vadd.f32 %v86, %v386
    %388 = vmatmul.f32.gmra.mxu0 %v177
    %v389 = vpop.f32.mrf.mxu0
    %v390 = vadd.f32 %v86, %v389
    %391 = vmatmul.f32.gmra.mxu0 %v180
    %v392 = vpop.f32.mrf.mxu0
    %v393 = vadd.f32 %v86, %v392
    %394 = vmatmul.f32.gmra.mxu0 %v183
    %v395 = vpop.f32.mrf.mxu0
    %v396 = vadd.f32 %v86, %v395
    %397 = vmatmul.f32.gmra.mxu0 %v186
    %v398 = vpop.f32.mrf.mxu0
    %v399 = vadd.f32 %v86, %v398
    %400 = vmatmul.f32.gmra.mxu0 %v189
    %v401 = vpop.f32.mrf.mxu0
    %v402 = vadd.f32 %v86, %v401
    %403 = vmatmul.f32.gmra.mxu0 %v192
    %v404 = vpop.f32.mrf.mxu0
    %v405 = vadd.f32 %v86, %v404
    %406 = vmatmul.f32.gmra.mxu0 %v195
    %v407 = vpop.f32.mrf.mxu0
    %v408 = vadd.f32 %v86, %v407
    %409 = vmatmul.f32.gmra.mxu0 %v198
    %v410 = vpop.f32.mrf.mxu0
    %v411 = vadd.f32 %v86, %v410
    %412 = vmatmul.f32.gmra.mxu0 %v201
    %v413 = vpop.f32.mrf.mxu0
    %v414 = vadd.f32 %v86, %v413
    %415 = vmatmul.f32.gmra.mxu0 %v204
    %v416 = vpop.f32.mrf.mxu0
    %v417 = vadd.f32 %v86, %v416
    %418 = vmatmul.f32.gmra.mxu0 %v207
    %v419 = vpop.f32.mrf.mxu0
    %v420 = vadd.f32 %v86, %v419
    %421 = vmatmul.f32.gmra.mxu0 %v210
    %v422 = vpop.f32.mrf.mxu0
    %v423 = vadd.f32 %v86, %v422
    %424 = vmatmul.f32.gmra.mxu0 %v213
    %v425 = vpop.f32.mrf.mxu0
    %v426 = vadd.f32 %v86, %v425
    %427 = vmatmul.f32.gmra.mxu0 %v216
    %v428 = vpop.f32.mrf.mxu0
    %v429 = vadd.f32 %v86, %v428
    %430 = vmatmul.f32.gmra.mxu0 %v219
    %v431 = vpop.f32.mrf.mxu0
    %v432 = vadd.f32 %v86, %v431
    %433 = vmatmul.f32.gmra.mxu0 %v222
    %v434 = vpop.f32.mrf.mxu0
    %v435 = vadd.f32 %v86, %v434
    %436 = vmatmul.f32.gmra.mxu0 %v225
    %v437 = vpop.f32.mrf.mxu0
    %v438 = vadd.f32 %v86, %v437
    %439 = vmatmul.f32.gmra.mxu0 %v228
    %v440 = vpop.f32.mrf.mxu0
    %v441 = vadd.f32 %v86, %v440
    %442 = vmatmul.f32.gmra.mxu0 %v231
    %v443 = vpop.f32.mrf.mxu0
    %v444 = vadd.f32 %v86, %v443
    %445 = vmatmul.f32.gmra.mxu0 %v234
    %v446 = vpop.f32.mrf.mxu0
    %v447 = vadd.f32 %v86, %v446
    %448 = vmatmul.f32.gmra.mxu0 %v237
    %v449 = vpop.f32.mrf.mxu0
    %v450 = vadd.f32 %v86, %v449
    %451 = vmatmul.f32.gmra.mxu0 %v240
    %v452 = vpop.f32.mrf.mxu0
    %v453 = vadd.f32 %v86, %v452
    %454 = vmatmul.f32.gmra.mxu0 %v243
    %v455 = vpop.f32.mrf.mxu0
    %v456 = vadd.f32 %v86, %v455
    %457 = vmatmul.f32.gmra.mxu0 %v246
    %v458 = vpop.f32.mrf.mxu0
    %v459 = vadd.f32 %v86, %v458
    %460 = vmatmul.f32.gmra.mxu0 %v249
    %v461 = vpop.f32.mrf.mxu0
    %v462 = vadd.f32 %v86, %v461
    %463 = vmatmul.f32.gmra.mxu0 %v252
    %v464 = vpop.f32.mrf.mxu0
    %v465 = vadd.f32 %v86, %v464
    %466 = vmatmul.f32.gmra.mxu0 %v255
    %v467 = vpop.f32.mrf.mxu0
    %v468 = vadd.f32 %v86, %v467
    %469 = vmatmul.f32.gmra.mxu0 %v258
    %v470 = vpop.f32.mrf.mxu0
    %v471 = vadd.f32 %v86, %v470
    %472 = vmatmul.f32.gmra.mxu0 %v261
    %v473 = vpop.f32.mrf.mxu0
    %v474 = vadd.f32 %v86, %v473
    %475 = vmatmul.f32.gmra.mxu0 %v264
    %v476 = vpop.f32.mrf.mxu0
    %v477 = vadd.f32 %v86, %v476
    %478 = vmatmul.f32.gmra.mxu0 %v267
    %v479 = vpop.f32.mrf.mxu0
    %v480 = vadd.f32 %v86, %v479
    %481 = vmatmul.f32.gmra.mxu0 %v270
    %v482 = vpop.f32.mrf.mxu0
    %v483 = vadd.f32 %v86, %v482
    %484 = vmatmul.f32.gmra.mxu0 %v273
    %v485 = vpop.f32.mrf.mxu0
    %v486 = vadd.f32 %v86, %v485
    %487 = vmatmul.f32.gmra.mxu0 %v276
    %v488 = vpop.f32.mrf.mxu0
    %v489 = vadd.f32 %v86, %v488
    %490 = vmatmul.f32.gmra.mxu0 %v279
    %v491 = vpop.f32.mrf.mxu0
    %v492 = vadd.f32 %v86, %v491
    %493 = vdwg.mxu0
    %494 = vst [vmem:[#allocation2] sm:$0xff] %v303
    %495 = vst [vmem:[#allocation2 + $0x8] sm:$0xff] %v306
    %496 = vst [vmem:[#allocation2 + $0x10] sm:$0xff] %v309
    %497 = vst [vmem:[#allocation2 + $0x18] sm:$0xff] %v312
    %498 = vst [vmem:[#allocation2 + $0x20] sm:$0xff] %v315
    %499 = vst [vmem:[#allocation2 + $0x28] sm:$0xff] %v318
    %500 = vst [vmem:[#allocation2 + $0x30] sm:$0xff] %v321
    %501 = vst [vmem:[#allocation2 + $0x38] sm:$0xff] %v324
    %502 = vst [vmem:[#allocation2 + $0x40] sm:$0xff] %v327
    %503 = vst [vmem:[#allocation2 + $0x48] sm:$0xff] %v330
    %504 = vst [vmem:[#allocation2 + $0x50] sm:$0xff] %v333
    %505 = vst [vmem:[#allocation2 + $0x58] sm:$0xff] %v336
    %506 = vst [vmem:[#allocation2 + $0x60] sm:$0xff] %v339
    %507 = vst [vmem:[#allocation2 + $0x68] sm:$0xff] %v342
    %508 = vst [vmem:[#allocation2 + $0x70] sm:$0xff] %v345
    %509 = vst [vmem:[#allocation2 + $0x78] sm:$0xff] %v348
    %510 = vst [vmem:[#allocation2 + $0x80] sm:$0xff] %v351
    %511 = vst [vmem:[#allocation2 + $0x88] sm:$0xff] %v354
    %512 = vst [vmem:[#allocation2 + $0x90] sm:$0xff] %v357
    %513 = vst [vmem:[#allocation2 + $0x98] sm:$0xff] %v360
    %514 = vst [vmem:[#allocation2 + $0xa0] sm:$0xff] %v363
    %515 = vst [vmem:[#allocation2 + $0xa8] sm:$0xff] %v366
    %516 = vst [vmem:[#allocation2 + $0xb0] sm:$0xff] %v369
    %517 = vst [vmem:[#allocation2 + $0xb8] sm:$0xff] %v372
    %518 = vst [vmem:[#allocation2 + $0xc0] sm:$0xff] %v375
    %519 = vst [vmem:[#allocation2 + $0xc8] sm:$0xff] %v378
    %520 = vst [vmem:[#allocation2 + $0xd0] sm:$0xff] %v381
    %521 = vst [vmem:[#allocation2 + $0xd8] sm:$0xff] %v384
    %522 = vst [vmem:[#allocation2 + $0xe0] sm:$0xff] %v387
    %523 = vst [vmem:[#allocation2 + $0xe8] sm:$0xff] %v390
    %524 = vst [vmem:[#allocation2 + $0xf0] sm:$0xff] %v393
    %525 = vst [vmem:[#allocation2 + $0xf8] sm:$0xff] %v396
    %526 = vst [vmem:[#allocation2 + $0x100] sm:$0xff] %v399
    %527 = vst [vmem:[#allocation2 + $0x108] sm:$0xff] %v402
    %528 = vst [vmem:[#allocation2 + $0x110] sm:$0xff] %v405
    %529 = vst [vmem:[#allocation2 + $0x118] sm:$0xff] %v408
    %530 = vst [vmem:[#allocation2 + $0x120] sm:$0xff] %v411
    %531 = vst [vmem:[#allocation2 + $0x128] sm:$0xff] %v414
    %532 = vst [vmem:[#allocation2 + $0x130] sm:$0xff] %v417
    %533 = vst [vmem:[#allocation2 + $0x138] sm:$0xff] %v420
    %534 = vst [vmem:[#allocation2 + $0x140] sm:$0xff] %v423
    %535 = vst [vmem:[#allocation2 + $0x148] sm:$0xff] %v426
    %536 = vst [vmem:[#allocation2 + $0x150] sm:$0xff] %v429
    %537 = vst [vmem:[#allocation2 + $0x158] sm:$0xff] %v432
    %538 = vst [vmem:[#allocation2 + $0x160] sm:$0xff] %v435
    %539 = vst [vmem:[#allocation2 + $0x168] sm:$0xff] %v438
    %540 = vst [vmem:[#allocation2 + $0x170] sm:$0xff] %v441
    %541 = vst [vmem:[#allocation2 + $0x178] sm:$0xff] %v444
    %542 = vst [vmem:[#allocation2 + $0x180] sm:$0xff] %v447
    %543 = vst [vmem:[#allocation2 + $0x188] sm:$0xff] %v450
    %544 = vst [vmem:[#allocation2 + $0x190] sm:$0xff] %v453
    %545 = vst [vmem:[#allocation2 + $0x198] sm:$0xff] %v456
    %546 = vst [vmem:[#allocation2 + $0x1a0] sm:$0xff] %v459
    %547 = vst [vmem:[#allocation2 + $0x1a8] sm:$0xff] %v462
    %548 = vst [vmem:[#allocation2 + $0x1b0] sm:$0xff] %v465
    %549 = vst [vmem:[#allocation2 + $0x1b8] sm:$0xff] %v468
    %550 = vst [vmem:[#allocation2 + $0x1c0] sm:$0xff] %v471
    %551 = vst [vmem:[#allocation2 + $0x1c8] sm:$0xff] %v474
    %552 = vst [vmem:[#allocation2 + $0x1d0] sm:$0xff] %v477
    %553 = vst [vmem:[#allocation2 + $0x1d8] sm:$0xff] %v480
    %554 = vst [vmem:[#allocation2 + $0x1e0] sm:$0xff] %v483
    %555 = vst [vmem:[#allocation2 + $0x1e8] sm:$0xff] %v486
    %556 = vst [vmem:[#allocation2 + $0x1f0] sm:$0xff] %v489
    %557 = vst [vmem:[#allocation2 + $0x1f8] sm:$0xff] %v492
    // Predicated region
    $region14: #{tpu_custom_call.1} parent=1 // pred_check
      _
    $region15: #{tpu_custom_call.1} parent=1 // pred_check_branch
      %559 = sbr.rel (0) target = $region17
    $region16: #{tpu_custom_call.1} parent=1 // pred_region
      %561 = vsyncadd [#allocation3], 0
      %s562 = sshll.u32 [#allocation2], 4
      %s563 = int_to_ptr.vmem [resolvable:$true] %s562
      %s564 = sshll.u32 %s3, 4
      %s565 = int_to_ptr.hbm [resolvable:$true] %s564
      %570 = dma.vmem_to_hbm [thread:$0]  %s563, 8192, %s565, [#allocation3], 128, 128, 8
    $region17: #{tpu_custom_call.1} parent=1 // pred_fallthru
      _
    // Predicated region
    $region18: #{tpu_custom_call.1} parent=1 // pred_check
      _
    $region19: #{tpu_custom_call.1} parent=1 // pred_check_branch
      %572 = sbr.rel (0) target = $region21
    $region20: #{tpu_custom_call.1} parent=1 // pred_region
      %574 = dma.done [#allocation3], 8192
    $region21: #{tpu_custom_call.1} parent=1 // pred_fallthru
      _
    %575 = vsyncpa [#allocation3], 1

</llo_original>
